<compile_context>
chip_gen: v7x
topology: tpu7x:2x2x1
jax: 0.10.0
libtpu: 0.0.40
codegen_flags: <defaults>
</compile_context>

<pallas_src>
import math
import functools

import jax
import jax.numpy as jnp
from jax.experimental import pallas as pl
from jax.experimental.pallas import tpu as pltpu


def _round_up(x: int, m: int) -> int:
    return ((x + m - 1) // m) * m


def _round_down(x: int, m: int) -> int:
    return (x // m) * m


def rmsnorm_kernel(x_ref, w_ref, o_ref, *, eps):
    """One (TILE_ROWS, H) slab: fp32 RMS statistics + scale, cast back."""
    x = x_ref[...].astype(jnp.float32)                   # (TR, H) fp32
    w = w_ref[...].astype(jnp.float32)                   # (1, H)

    var = jnp.mean(x * x, axis=-1, keepdims=True)        # (TR, 1) fp32
    inv = jax.lax.rsqrt(var + jnp.float32(eps))           # EUP rsqrt
    o_ref[...] = (w * (x * inv)).astype(o_ref.dtype)


def _choose_tile_rows(rows, H, in_bytes, out_bytes, vmem_budget_bytes):
    """Largest row tile (multiple of 8) whose double-buffered working set fits."""
    in_row = H * in_bytes
    out_row = H * out_bytes
    temp_row = 2 * H * 4                       # fp32 upcast slab + scaled product
    per_row = 2 * in_row + 2 * out_row + temp_row   # 2x: pipeline double buffers
    tr = max(8, _round_down(vmem_budget_bytes // per_row, 8))
    tr = min(tr, _round_up(rows, 8))
    return tr, per_row


def rms_norm(hidden_states, weight, *, eps=1e-5, tile_rows=None,
             vmem_budget_bytes=32 << 20):
    """JAX wrapper reproducing RMSNorm.forward for any leading shape.

    hidden_states: [..., H]   weight: [H]   -> output: [..., H] (input dtype)
    tile_rows=None -> adaptive from the VMEM budget; otherwise forced (rounded
    to a multiple of 8).
    """
    orig_shape = hidden_states.shape
    H = orig_shape[-1]
    rows = int(math.prod(orig_shape[:-1])) if len(orig_shape) > 1 else 1

    x2 = hidden_states.reshape(rows, H)
    w2 = weight.reshape(1, H)

    in_bytes = x2.dtype.itemsize
    out_bytes = in_bytes

    if tile_rows is None:
        tr, per_row = _choose_tile_rows(rows, H, in_bytes, out_bytes,
                                        vmem_budget_bytes)
    else:
        tr = min(max(8, _round_up(int(tile_rows), 8)), _round_up(rows, 8))
        per_row = 2 * H * in_bytes + 2 * H * out_bytes + 2 * H * 4

    # If everything fits in one block, use the exact row count (a block equal
    # to the full array dim is always layout-legal, even when rows % 8 != 0).
    if tr >= rows:
        tr = rows

    # TODO(synk): if even an 8-row slab overflows the VMEM budget (H in the
    # hundreds of thousands), tile H on a second "arbitrary" grid axis and
    # accumulate sum-of-squares in scratch; not needed for real LLM sizes.

    grid = (pl.cdiv(rows, tr),)

    # Explicit scoped-VMEM limit: working set + headroom, capped for v7x's
    # 64 MiB/TC (v5e/v6e have 128 MiB physical, so 48 MiB is safe everywhere).
    working_set = tr * per_row + 2 * H * 4          # + double-buffered weight
    vmem_limit = min(48 << 20,
                     max(int(working_set) * 5 // 4 + (1 << 20), 16 << 20))

    cost = pl.CostEstimate(
        flops=4 * rows * H,
        transcendentals=rows,
        bytes_accessed=rows * H * (in_bytes + out_bytes)
        + H * weight.dtype.itemsize,
    )

    out = pl.pallas_call(
        functools.partial(rmsnorm_kernel, eps=float(eps)),
        out_shape=jax.ShapeDtypeStruct((rows, H), hidden_states.dtype),
        grid=grid,
        in_specs=[
            pl.BlockSpec((tr, H), lambda i: (i, 0)),   # row slab of x
            pl.BlockSpec((1, H), lambda i: (0, 0)),    # weight, reused each step
        ],
        out_specs=pl.BlockSpec((tr, H), lambda i: (i, 0)),
        compiler_params=pltpu.CompilerParams(
            dimension_semantics=("parallel",),
            vmem_limit_bytes=vmem_limit,
        ),
        cost_estimate=cost,
    )(x2, w2)

    return out.reshape(orig_shape)


def rms_norm_ref(hidden_states, weight, *, eps=1e-5):
    """Pure-jnp reference mirroring the PyTorch forward."""
    input_dtype = hidden_states.dtype
    xf = hidden_states.astype(jnp.float32)
    var = jnp.mean(xf * xf, axis=-1, keepdims=True)
    y = xf * jax.lax.rsqrt(var + jnp.float32(eps))
    return (weight.astype(jnp.float32) * y).astype(input_dtype)


if __name__ == "__main__":
    # Small shapes consistent with the module: [batch, seq, hidden].
    b, s, h = 2, 8, 128
    eps = 1e-5

    key = jax.random.PRNGKey(0)
    kx, kw, kx2, kx3 = jax.random.split(key, 4)
    x = jax.random.normal(kx, (b, s, h), dtype=jnp.float32)
    w = jax.random.normal(kw, (h,), dtype=jnp.float32)

    # 1) fp32, rows fit in a single block.
    out = jax.block_until_ready(rms_norm(x, w, eps=eps))
    ref = rms_norm_ref(x, w, eps=eps)
    assert out.shape == x.shape and out.dtype == x.dtype
    assert jnp.allclose(out, ref, atol=1e-5, rtol=1e-5), "fp32 mismatch"

    # 2) bf16 input (fp32 statistics, cast back), rows=15 exercises a single
    #    partial block (no padding pass; Pallas masks the OOB rows).
    xb = jax.random.normal(kx2, (3, 5, h), dtype=jnp.bfloat16)
    wb = w.astype(jnp.bfloat16)
    outb = jax.block_until_ready(rms_norm(xb, wb, eps=eps))
    refb = rms_norm_ref(xb, wb, eps=eps)
    assert outb.dtype == jnp.bfloat16
    assert jnp.allclose(outb.astype(jnp.float32), refb.astype(jnp.float32),
                        atol=2e-2, rtol=2e-2), "bf16 mismatch"

    # 3) forced small tile: rows=20, tile_rows=8 -> 3 grid steps with a
    #    partial last block (multi-step pipeline + masked final writeback).
    x3 = jax.random.normal(kx3, (2, 10, h), dtype=jnp.float32)
    out3 = jax.block_until_ready(rms_norm(x3, w, eps=eps, tile_rows=8))
    ref3 = rms_norm_ref(x3, w, eps=eps)
    assert jnp.allclose(out3, ref3, atol=1e-5, rtol=1e-5), "partial-tile mismatch"

    print("KERNEL_OK")
</pallas_src>

<mosaic_0001>
module attributes {stable_mosaic.version = 11 : i64} {
  func.func @rmsnorm_kernel(%arg0: i32, %arg1: memref<16x128xf32, #tpu.memory_space<vmem>>, %arg2: memref<1x128xf32, #tpu.memory_space<vmem>>, %arg3: memref<16x128xf32, #tpu.memory_space<vmem>>) attributes {dimension_semantics = [#tpu.dimension_semantics<parallel>], iteration_bounds = array<i64: 1>, scalar_prefetch = 0 : i64, scratch_operands = 0 : i64, tpu.core_type = #tpu.core_type<tc>, window_params = [{transform_indices = @transform_0, window_bounds = array<i64: 16, 128>}, {pipeline_mode = #tpu.pipeline_mode<synchronous>, transform_indices = @transform_1, window_bounds = array<i64: 1, 128>}, {transform_indices = @transform_2, window_bounds = array<i64: 16, 128>}]} {
    %c0 = arith.constant 0 : index
    %c0_0 = arith.constant 0 : index
    %0 = vector.load %arg1[%c0, %c0_0] : memref<16x128xf32, #tpu.memory_space<vmem>>, vector<16x128xf32>
    %c0_1 = arith.constant 0 : index
    %c0_2 = arith.constant 0 : index
    %1 = vector.load %arg2[%c0_1, %c0_2] : memref<1x128xf32, #tpu.memory_space<vmem>>, vector<1x128xf32>
    %2 = arith.mulf %0, %0 : vector<16x128xf32>
    %cst = arith.constant dense<0.000000e+00> : vector<16xf32>
    %3 = vector.multi_reduction <add>, %2, %cst [1] : vector<16x128xf32> to vector<16xf32>
    %4 = vector.shape_cast %3 : vector<16xf32> to vector<16x1xf32>
    %cst_3 = arith.constant 1.280000e+02 : f32
    %5 = vector.broadcast %cst_3 : f32 to vector<16x1xf32>
    %6 = arith.divf %4, %5 : vector<16x1xf32>
    %cst_4 = arith.constant 9.99999974E-6 : f32
    %7 = vector.broadcast %cst_4 : f32 to vector<16x1xf32>
    %8 = arith.addf %6, %7 : vector<16x1xf32>
    %9 = math.rsqrt %8 : vector<16x1xf32>
    %10 = vector.broadcast %9 : vector<16x1xf32> to vector<16x128xf32>
    %11 = arith.mulf %0, %10 : vector<16x128xf32>
    %12 = vector.broadcast %1 : vector<1x128xf32> to vector<16x128xf32>
    %13 = arith.mulf %12, %11 : vector<16x128xf32>
    %c0_5 = arith.constant 0 : index
    %c0_6 = arith.constant 0 : index
    %14 = vector.load %arg3[%c0_5, %c0_6] : memref<16x128xf32, #tpu.memory_space<vmem>>, vector<16x128xf32>
    tpu.vector_store %arg3[%c0_5, %c0_6], %13 {strides = array<i32>} : memref<16x128xf32, #tpu.memory_space<vmem>>, vector<16x128xf32>,
    return
  }
  func.func @transform_0(%arg0: i32) -> (i32, i32) {
    %c0_i32 = arith.constant 0 : i32
    %c0_i32_0 = arith.constant 0 : i32
    return %arg0, %c0_i32 : i32, i32
  }
  func.func @transform_1(%arg0: i32) -> (i32, i32) {
    %c0_i32 = arith.constant 0 : i32
    %c0_i32_0 = arith.constant 0 : i32
    %c0_i32_1 = arith.constant 0 : i32
    return %c0_i32, %c0_i32_0 : i32, i32
  }
  func.func @transform_2(%arg0: i32) -> (i32, i32) {
    %c0_i32 = arith.constant 0 : i32
    %c0_i32_0 = arith.constant 0 : i32
    return %arg0, %c0_i32 : i32, i32
  }
}

</mosaic_0001>

<llo_original>
// kernel: tpu_custom_call.1
$region0: #{tpu_custom_call.1}
  #allocation0 [shape = 'u32[]', space=smem, size = 0x4, offset = 0x4, fixed_abs, tag = 'smem constant byte address 0x4 - core index']
  #allocation1 [shape = 'u32[144,128]{1,0:T(1,128)}', space=vmem, size = 0x12000, scoped, tag = 'internal scratch']
  %s0 = inlined_call_operand.hbm [shape: f32[16,128], index: 0, kind: input, shape index: {}]
  %s1 = inlined_call_operand.vmem [shape: f32[1,128], index: 1, kind: input, shape index: {}]
  %s2 = inlined_call_operand.hbm [shape: f32[16,128], index: 2, kind: output, shape index: {}]
  %s3 = sld [smem:[#allocation0]]
  $region22: #{tpu_custom_call.1} parent=0
    _
  %s5 = ssub.s32 1, %s3
  %s6 = scalar_select 0, %s5, %s3
  $region1: #{tpu_custom_call.1} parent=0
    #allocation2 [shape = 'u8[8192]{0}', space=vmem, size = 0x2000, scoped, tag = 'input window, operand 0, single buffered']
    #allocation3 [shape = 's32[1]{0}', space=sflag, size = 0x4, scoped, tag = 'scoped memory for tpu_custom_call.1']
    #allocation4 [shape = 's32[1]{0}', space=sflag, size = 0x4, scoped, tag = 'scoped memory for tpu_custom_call.1']
    #allocation5 [shape = 'u8[8192]{0}', space=vmem, size = 0x2000, scoped, tag = 'output window, operand 0, single buffered']
    %7 = vsyncpa [#allocation3], 0
    %8 = vsyncpa [#allocation4], 0
    // Predicated region
    $region2: #{tpu_custom_call.1} parent=1 // pred_check
      _
    $region3: #{tpu_custom_call.1} parent=1 // pred_check_branch
      %10 = sbr.rel (0) target = $region5
    $region4: #{tpu_custom_call.1} parent=1 // pred_region
      %s12 = ssub.s32 256, 256
      %13 = vsyncadd [#allocation3], %s12
      %s14 = sshll.u32 [#allocation2], 4
      %s15 = int_to_ptr.vmem [resolvable:$true] %s14
      %20 = dma.hbm_to_vmem [thread:$0]  %s0, 256, %s15, [#allocation3], 128, 128, 8
    $region5: #{tpu_custom_call.1} parent=1 // pred_fallthru
      _
    // Predicated region
    $region6: #{tpu_custom_call.1} parent=1 // pred_check
      _
    $region7: #{tpu_custom_call.1} parent=1 // pred_check_branch
      %22 = sbr.rel (0) target = $region9
    $region8: #{tpu_custom_call.1} parent=1 // pred_region
      _
    $region9: #{tpu_custom_call.1} parent=1 // pred_fallthru
      _
    // Predicated region
    $region10: #{tpu_custom_call.1} parent=1 // pred_check
      _
    $region11: #{tpu_custom_call.1} parent=1 // pred_check_branch
      %24 = sbr.rel (0) target = $region13
    $region12: #{tpu_custom_call.1} parent=1 // pred_region
      %25 = dma.done [#allocation3], 256
    $region13: #{tpu_custom_call.1} parent=1 // pred_fallthru
      _
    %v26 = vld [vmem:[#allocation2] sm:$0xff]
    %v27 = vld [vmem:[#allocation2 + $0x8] sm:$0xff]
    %v28 = vld [vmem:[%s1] sm:$0x1]
    %v29 = vmul.f32 %v26, %v26
    %v30 = vmul.f32 %v27, %v27
    %31 = vadd.xlane.f32.xlu0 %v29
    %v32 = vpop.xlane.xlu0 %31
    %33 = vadd.xlane.f32.xlu0 %v30
    %v34 = vpop.xlane.xlu0 %33
    %v35 = vrcp.pop 128.0
    %v36 = vmul.f32 %v32, %v35
    %v37 = vmul.f32 %v34, %v35
    %v38 = vadd.f32 %v36, 1e-05
    %v39 = vadd.f32 %v37, 1e-05
    %v40 = vrsqrt.pop %v38
    %v41 = vrsqrt.pop %v39
    %v42 = vmul.f32 %v26, %v40
    %v43 = vmul.f32 %v27, %v41
    %v45 = vlaneseq
    %v46 = vshrl.u32 %v45, 7
    %v47 = vsub.s32 0, %v46
    %v48 = vrot.slane %v28, %v47
    %v50 = vmul.f32 %v48, %v42
    %v51 = vmul.f32 %v48, %v43
    %52 = vst [vmem:[#allocation5] sm:$0xff] %v50
    %53 = vst [vmem:[#allocation5 + $0x8] sm:$0xff] %v51
    // Predicated region
    $region14: #{tpu_custom_call.1} parent=1 // pred_check
      _
    $region15: #{tpu_custom_call.1} parent=1 // pred_check_branch
      %55 = sbr.rel (0) target = $region17
    $region16: #{tpu_custom_call.1} parent=1 // pred_region
      %s57 = ssub.s32 256, 256
      %58 = vsyncadd [#allocation4], %s57
      %s59 = sshll.u32 [#allocation5], 4
      %s60 = int_to_ptr.vmem [resolvable:$true] %s59
      %65 = dma.vmem_to_hbm [thread:$0]  %s60, 256, %s2, [#allocation4], 128, 128, 8
    $region17: #{tpu_custom_call.1} parent=1 // pred_fallthru
      _
    // Predicated region
    $region18: #{tpu_custom_call.1} parent=1 // pred_check
      _
    $region19: #{tpu_custom_call.1} parent=1 // pred_check_branch
      %67 = sbr.rel (0) target = $region21
    $region20: #{tpu_custom_call.1} parent=1 // pred_region
      %68 = dma.done [#allocation4], 256
    $region21: #{tpu_custom_call.1} parent=1 // pred_fallthru
      _
    %69 = vsyncpa [#allocation3], 1
    %70 = vsyncpa [#allocation4], 1

</llo_original>
